<compile_context>
chip_gen: v7x
topology: tpu7x:2x2x1
jax: 0.10.0
libtpu: 0.0.40
codegen_flags: <defaults>
</compile_context>

<pallas_src>
import math

import jax
import jax.numpy as jnp
from jax.experimental import pallas as pl
from jax.experimental.pallas import tpu as pltpu

_NEG_INF = float("-inf")

# Compatibility shim: newer jax exposes pltpu.CompilerParams, older TPUCompilerParams.
_CompilerParams = getattr(pltpu, "CompilerParams", None)
if _CompilerParams is None:  # pragma: no cover
    _CompilerParams = getattr(pltpu, "TPUCompilerParams")


def _round_up(x, m):
    return (x + m - 1) // m * m


def _softplus(x):
    # numerically stable softplus; softplus(-inf) = 0 as in torch.
    return jnp.maximum(x, 0.0) + jnp.log1p(jnp.exp(-jnp.abs(x)))


def _make_csl_kernel(margins, scale, num_levels, p_valid, p_padded, tp):
    margins = tuple(float(m) for m in margins)
    scale = float(scale)
    has_pad = p_padded != p_valid

    def kernel(emb_ref, wt_ref, lab_ref, plab_ref, out_ref,
               m_pos_ref, m_neg_ref, s_neg_ref, s_pos_ref):
        p_idx = pl.program_id(1)

        # ---- init streaming-logsumexp state on the first proxy tile ---------
        @pl.when(p_idx == 0)
        def _init():
            m_pos_ref[...] = jnp.full_like(m_pos_ref, _NEG_INF)
            m_neg_ref[...] = jnp.full_like(m_neg_ref, _NEG_INF)
            s_neg_ref[...] = jnp.zeros_like(s_neg_ref)
            s_pos_ref[...] = jnp.zeros_like(s_pos_ref)

        # ---- similarity tile on the MXU: (TB, D) @ (D, TP) -------------------
        emb = emb_ref[...]
        wt = wt_ref[...]
        raw = jnp.dot(emb, wt, preferred_element_type=jnp.float32)     # (TB, TP)

        # fold per-proxy L2 normalization + `scale` into one column scale.
        wt_f32 = wt.astype(jnp.float32)
        col_ss = jnp.sum(wt_f32 * wt_f32, axis=0, keepdims=True)        # (1, TP)
        col_scale = scale / jnp.maximum(jnp.sqrt(col_ss), 1e-12)        # (1, TP)
        z = raw * col_scale                        # scale * <emb, normalize(w)>

        # validity of proxy columns (P padded up to a lane multiple).
        if has_pad:
            col = jax.lax.broadcasted_iota(jnp.int32, (1, tp), 1) + p_idx * tp
            valid = col < p_valid                                       # (1, TP)
            z_hi = jnp.where(valid, z, _NEG_INF)    # +z direction (neg-set LSE)
            z_lo = jnp.where(valid, -z, _NEG_INF)   # -z direction (pos-set LSE)
        else:
            valid = None
            z_hi = z
            z_lo = -z

        # ---- online logsumexp: update running maxima / rescale factors ------
        m_pos_old = m_pos_ref[...]
        m_neg_old = m_neg_ref[...]
        m_pos_new = jnp.maximum(m_pos_old, jnp.max(z_hi, axis=1, keepdims=True))
        m_neg_new = jnp.maximum(m_neg_old, jnp.max(z_lo, axis=1, keepdims=True))
        alpha_pos = jnp.where(m_pos_old == _NEG_INF, 0.0,
                              jnp.exp(m_pos_old - m_pos_new))
        alpha_neg = jnp.where(m_neg_old == _NEG_INF, 0.0,
                              jnp.exp(m_neg_old - m_neg_new))

        # one exponential per direction, shared by every hierarchy level.
        e_hi = jnp.exp(z_hi - m_pos_new)            # (TB, TP); 0 on padded cols
        e_lo = jnp.exp(z_lo - m_neg_new)            # (TB, TP); 0 on padded cols

        labels = lab_ref[...]                       # (TB, L) int32
        plabels = plab_ref[...]                     # (L, TP) int32

        for lvl in range(num_levels):
            pos = labels[:, lvl:lvl + 1] == plabels[lvl:lvl + 1, :]     # (TB, TP)
            neg = jnp.logical_not(pos)
            if valid is not None:
                neg = jnp.logical_and(neg, valid)
            blk_neg = jnp.sum(jnp.where(neg, e_hi, 0.0), axis=1, keepdims=True)
            s_neg_ref[:, lvl:lvl + 1] = (s_neg_ref[:, lvl:lvl + 1] * alpha_pos
                                         + blk_neg)
            if lvl == 0:
                blk_pos = jnp.sum(jnp.where(pos, e_lo, 0.0), axis=1,
                                  keepdims=True)
                s_pos_ref[...] = s_pos_ref[...] * alpha_neg + blk_pos

        m_pos_ref[...] = m_pos_new
        m_neg_ref[...] = m_neg_new

        # ---- finalize on the last proxy tile ---------------------------------
        @pl.when(p_idx == pl.num_programs(1) - 1)
        def _finalize():
            lse_pos_high = m_neg_ref[...] + jnp.log(s_pos_ref[...])     # (TB, 1)
            for lvl in range(num_levels):
                lse_neg = m_pos_ref[...] + jnp.log(s_neg_ref[:, lvl:lvl + 1])
                out_ref[:, lvl:lvl + 1] = _softplus(
                    lse_neg + lse_pos_high + margins[lvl] * scale)

    return kernel


def csl_loss_pallas(embeddings, weight, labels, proxy_labels,
                    margins=(0.25, 0.35, 0.45), scale=32.0, reduce_type='sum',
                    block_b=128, block_p=512, matmul_dtype=jnp.float32):
    """Forward pass of CSLLoss.  Returns scalar for 'sum'/'mean', (L,) for 'none'."""
    B, D = embeddings.shape
    P, D2 = weight.shape
    assert D == D2
    L = labels.shape[1]
    assert proxy_labels.shape == (P, L)
    assert len(margins) == L

    # Tile sizes respecting the (8, 128) sublane/lane constraint.  Defaults keep
    # the per-step working set (tiles + (TB, TP) temporaries) a few MiB, well
    # under v7x's 64 MiB physical / 32 MiB scoped VMEM.
    TB = _round_up(min(int(block_b), _round_up(B, 8)), 8)
    TP = _round_up(min(int(block_p), _round_up(P, 128)), 128)
    Bp = _round_up(B, TB)
    Pp = _round_up(P, TP)
    n_b = Bp // TB
    n_p = Pp // TP

    f32 = jnp.float32
    # Pad + lay out operands: embeddings (Bp, D); weight pre-transposed to a
    # lane-dense (D, Pp) MXU RHS; proxy labels transposed to (L, Pp).
    emb = jnp.zeros((Bp, D), matmul_dtype).at[:B].set(embeddings.astype(matmul_dtype))
    wt = jnp.zeros((D, Pp), matmul_dtype).at[:, :P].set(weight.astype(matmul_dtype).T)
    lab = jnp.zeros((Bp, L), jnp.int32).at[:B].set(labels.astype(jnp.int32))
    plab = jnp.zeros((L, Pp), jnp.int32).at[:, :P].set(proxy_labels.astype(jnp.int32).T)

    kernel = _make_csl_kernel(margins, scale, L, P, Pp, TP)

    per_sample = pl.pallas_call(
        kernel,
        out_shape=jax.ShapeDtypeStruct((Bp, L), f32),
        grid=(n_b, n_p),
        in_specs=[
            pl.BlockSpec((TB, D), lambda b, p: (b, 0)),   # embeddings
            pl.BlockSpec((D, TP), lambda b, p: (0, p)),   # weight^T (streamed)
            pl.BlockSpec((TB, L), lambda b, p: (b, 0)),   # sample labels
            pl.BlockSpec((L, TP), lambda b, p: (0, p)),   # proxy labels^T (streamed)
        ],
        out_specs=pl.BlockSpec((TB, L), lambda b, p: (b, 0)),
        scratch_shapes=[
            pltpu.VMEM((TB, 1), f32),    # running max, +z direction
            pltpu.VMEM((TB, 1), f32),    # running max, -z direction
            pltpu.VMEM((TB, L), f32),    # per-level negative-set partial sums
            pltpu.VMEM((TB, 1), f32),    # level-0 positive-set partial sum
        ],
        compiler_params=_CompilerParams(
            dimension_semantics=("parallel", "arbitrary"),
            vmem_limit_bytes=32 * 1024 * 1024),
    )(emb, wt, lab, plab)

    # Tiny final reduction in XLA (padded rows are sliced away before the mean).
    per_level = jnp.mean(per_sample[:B], axis=0)          # (L,)
    if reduce_type == 'sum':
        return jnp.sum(per_level)
    if reduce_type == 'mean':
        return jnp.sum(per_level) / L
    if reduce_type == 'none':
        return per_level
    raise ValueError(f"unknown reduce_type: {reduce_type}")


def csl_loss_ref(embeddings, weight, labels, proxy_labels, margins, scale,
                 reduce_type='sum'):
    """Pure-JAX reference mirroring the PyTorch forward (f32, high precision)."""
    p = weight / jnp.maximum(jnp.linalg.norm(weight, axis=1, keepdims=True), 1e-12)
    sim = jnp.matmul(embeddings, p.T, precision=jax.lax.Precision.HIGHEST)
    losses = []
    lse_pos_high = None
    for lvl in range(labels.shape[1]):
        pos = labels[:, lvl][:, None] == proxy_labels[:, lvl][None, :]
        lse_neg = jax.scipy.special.logsumexp(
            jnp.where(~pos, sim * scale, -jnp.inf), axis=1)
        if lvl == 0:
            lse_pos_high = jax.scipy.special.logsumexp(
                jnp.where(pos, -sim * scale, -jnp.inf), axis=1)
        losses.append(jnp.mean(jax.nn.softplus(
            lse_neg + lse_pos_high + margins[lvl] * scale)))
    if reduce_type == 'sum':
        return sum(losses)
    if reduce_type == 'mean':
        return sum(losses) / len(losses)
    return jnp.stack(losses)


def _make_inputs(key, B, D, P, fan1, fan2):
    k_w, k_e, k_l = jax.random.split(key, 3)
    stdv = 1.0 / math.sqrt(D)                      # init_proxies: uniform(-stdv, stdv)
    weight = jax.random.uniform(k_w, (P, D), jnp.float32, -stdv, stdv)
    emb = jax.random.normal(k_e, (B, D), jnp.float32)
    emb = emb / jnp.linalg.norm(emb, axis=1, keepdims=True)
    fine = jnp.arange(P, dtype=jnp.int32)          # register_labels: hierarchy per proxy
    plabels = jnp.stack([fine, fine // fan1, fine // fan2], axis=1)
    sfine = jax.random.randint(k_l, (B,), 0, P, dtype=jnp.int32)
    labels = jnp.stack([sfine, sfine // fan1, sfine // fan2], axis=1)
    return emb, weight, labels, plabels


if __name__ == "__main__":
    margins = (0.25, 0.35, 0.45)
    scale = 32.0
    k1, k2 = jax.random.split(jax.random.PRNGKey(0))

    # --- test 1: small shapes (single tile), all reduce types ----------------
    emb, w, lab, plab = _make_inputs(k1, B=8, D=128, P=16, fan1=4, fan2=8)
    loss = jax.block_until_ready(
        csl_loss_pallas(emb, w, lab, plab, margins=margins, scale=scale,
                        reduce_type='sum'))
    ref = csl_loss_ref(emb, w, lab, plab, margins, scale, 'sum')
    assert jnp.isfinite(loss), loss
    assert jnp.allclose(loss, ref, rtol=2e-3, atol=2e-3), (loss, ref)

    loss_mean = csl_loss_pallas(emb, w, lab, plab, margins=margins, scale=scale,
                                reduce_type='mean')
    ref_mean = csl_loss_ref(emb, w, lab, plab, margins, scale, 'mean')
    assert jnp.allclose(loss_mean, ref_mean, rtol=2e-3, atol=2e-3), (loss_mean, ref_mean)

    loss_none = csl_loss_pallas(emb, w, lab, plab, margins=margins, scale=scale,
                                reduce_type='none')
    ref_none = csl_loss_ref(emb, w, lab, plab, margins, scale, 'none')
    assert jnp.allclose(loss_none, ref_none, rtol=2e-3, atol=2e-3), (loss_none, ref_none)

    # --- test 2: padded B/P + multi-tile streaming logsumexp path ------------
    emb2, w2, lab2, plab2 = _make_inputs(k2, B=24, D=128, P=200, fan1=10, fan2=40)
    loss2 = jax.block_until_ready(
        csl_loss_pallas(emb2, w2, lab2, plab2, margins=margins, scale=scale,
                        reduce_type='sum', block_b=8, block_p=128))
    ref2 = csl_loss_ref(emb2, w2, lab2, plab2, margins, scale, 'sum')
    assert jnp.isfinite(loss2), loss2
    assert jnp.allclose(loss2, ref2, rtol=2e-3, atol=2e-3), (loss2, ref2)

    # --- test 3: bf16 MXU inputs with f32 accumulation (looser tolerance) ----
    loss_bf16 = jax.block_until_ready(
        csl_loss_pallas(emb2, w2, lab2, plab2, margins=margins, scale=scale,
                        reduce_type='sum', block_b=8, block_p=128,
                        matmul_dtype=jnp.bfloat16))
    assert jnp.isfinite(loss_bf16), loss_bf16
    assert jnp.allclose(loss_bf16, ref2, rtol=5e-2, atol=5e-2), (loss_bf16, ref2)

    print("KERNEL_OK")
</pallas_src>

<mosaic_0001>
module attributes {stable_mosaic.version = 11 : i64} {
  func.func @kernel(%arg0: i32, %arg1: i32, %arg2: memref<8x128xf32, #tpu.memory_space<vmem>>, %arg3: memref<128x128xf32, #tpu.memory_space<vmem>>, %arg4: memref<8x3xi32, #tpu.memory_space<vmem>>, %arg5: memref<3x128xi32, #tpu.memory_space<vmem>>, %arg6: memref<8x3xf32, #tpu.memory_space<vmem>>, %arg7: memref<8x1xf32, #tpu.memory_space<vmem>>, %arg8: memref<8x1xf32, #tpu.memory_space<vmem>>, %arg9: memref<8x3xf32, #tpu.memory_space<vmem>>, %arg10: memref<8x1xf32, #tpu.memory_space<vmem>>) attributes {dimension_semantics = [#tpu.dimension_semantics<parallel>, #tpu.dimension_semantics<arbitrary>], iteration_bounds = array<i64: 1, 1>, scalar_prefetch = 0 : i64, scratch_operands = 4 : i64, tpu.core_type = #tpu.core_type<tc>, window_params = [{transform_indices = @transform_0, window_bounds = array<i64: 8, 128>}, {transform_indices = @transform_1, window_bounds = array<i64: 128, 128>}, {transform_indices = @transform_2, window_bounds = array<i64: 8, 3>}, {transform_indices = @transform_3, window_bounds = array<i64: 3, 128>}, {transform_indices = @transform_4, window_bounds = array<i64: 8, 3>}]} {
    %c0_i32 = arith.constant 0 : i32
    %0 = arith.cmpi eq, %arg1, %c0_i32 : i32
    %1 = arith.extui %0 : i1 to i32
    %c0_i32_0 = arith.constant 0 : i32
    %2 = arith.cmpi ne, %1, %c0_i32_0 : i32
    scf.if %2 {
      %cst_55 = arith.constant 0xFF800000 : f32
      %121 = vector.broadcast %cst_55 : f32 to vector<8x1xf32>
      %c0_56 = arith.constant 0 : index
      %c0_57 = arith.constant 0 : index
      %122 = vector.load %arg7[%c0_56, %c0_57] : memref<8x1xf32, #tpu.memory_space<vmem>>, vector<8x1xf32>
      tpu.vector_store %arg7[%c0_56, %c0_57], %121 {strides = array<i32>} : memref<8x1xf32, #tpu.memory_space<vmem>>, vector<8x1xf32>,
      %cst_58 = arith.constant 0xFF800000 : f32
      %123 = vector.broadcast %cst_58 : f32 to vector<8x1xf32>
      %c0_59 = arith.constant 0 : index
      %c0_60 = arith.constant 0 : index
      %124 = vector.load %arg8[%c0_59, %c0_60] : memref<8x1xf32, #tpu.memory_space<vmem>>, vector<8x1xf32>
      tpu.vector_store %arg8[%c0_59, %c0_60], %123 {strides = array<i32>} : memref<8x1xf32, #tpu.memory_space<vmem>>, vector<8x1xf32>,
      %cst_61 = arith.constant 0.000000e+00 : f32
      %125 = vector.broadcast %cst_61 : f32 to vector<8x3xf32>
      %c0_62 = arith.constant 0 : index
      %c0_63 = arith.constant 0 : index
      %126 = vector.load %arg9[%c0_62, %c0_63] : memref<8x3xf32, #tpu.memory_space<vmem>>, vector<8x3xf32>
      tpu.vector_store %arg9[%c0_62, %c0_63], %125 {strides = array<i32>} : memref<8x3xf32, #tpu.memory_space<vmem>>, vector<8x3xf32>,
      %cst_64 = arith.constant 0.000000e+00 : f32
      %127 = vector.broadcast %cst_64 : f32 to vector<8x1xf32>
      %c0_65 = arith.constant 0 : index
      %c0_66 = arith.constant 0 : index
      %128 = vector.load %arg10[%c0_65, %c0_66] : memref<8x1xf32, #tpu.memory_space<vmem>>, vector<8x1xf32>
      tpu.vector_store %arg10[%c0_65, %c0_66], %127 {strides = array<i32>} : memref<8x1xf32, #tpu.memory_space<vmem>>, vector<8x1xf32>,
    } else {
    }
    %c0 = arith.constant 0 : index
    %c0_1 = arith.constant 0 : index
    %3 = vector.load %arg2[%c0, %c0_1] : memref<8x128xf32, #tpu.memory_space<vmem>>, vector<8x128xf32>
    %c0_2 = arith.constant 0 : index
    %c0_3 = arith.constant 0 : index
    %4 = vector.load %arg3[%c0_2, %c0_3] : memref<128x128xf32, #tpu.memory_space<vmem>>, vector<128x128xf32>
    %cst = arith.constant dense<0.000000e+00> : vector<8x128xf32>
    %5 = tpu.matmul %3, %4, %cst {dimension_numbers = #tpu.dot_dimension_numbers<[1], [0], [0], [1], [0, 0, 1, 1], [], []>} : vector<8x128xf32>, vector<128x128xf32>, vector<8x128xf32> -> vector<8x128xf32>
    %6 = arith.mulf %4, %4 : vector<128x128xf32>
    %cst_4 = arith.constant dense<0.000000e+00> : vector<128xf32>
    %7 = vector.multi_reduction <add>, %6, %cst_4 [0] : vector<128x128xf32> to vector<128xf32>
    %8 = vector.shape_cast %7 : vector<128xf32> to vector<1x128xf32>
    %9 = math.sqrt %8 : vector<1x128xf32>
    %cst_5 = arith.constant 9.99999996E-13 : f32
    %10 = vector.broadcast %cst_5 : f32 to vector<1x128xf32>
    %11 = arith.maximumf %9, %10 : vector<1x128xf32>
    %cst_6 = arith.constant 3.200000e+01 : f32
    %12 = vector.broadcast %cst_6 : f32 to vector<1x128xf32>
    %13 = arith.divf %12, %11 : vector<1x128xf32>
    %14 = vector.broadcast %13 : vector<1x128xf32> to vector<8x128xf32>
    %15 = arith.mulf %5, %14 : vector<8x128xf32>
    %16 = tpu.iota {dimensions = array<i32: 1>} : vector<1x128xi32>
    %c128_i32 = arith.constant 128 : i32
    %17 = arith.muli %arg1, %c128_i32 : i32
    %18 = vector.broadcast %17 : i32 to vector<1x128xi32>
    %19 = arith.addi %16, %18 : vector<1x128xi32>
    %c16_i32 = arith.constant 16 : i32
    %20 = vector.broadcast %c16_i32 : i32 to vector<1x128xi32>
    %21 = arith.cmpi slt, %19, %20 : vector<1x128xi32>
    %cst_7 = arith.constant 0xFF800000 : f32
    %22 = vector.shape_cast %21 : vector<1x128xi1> to vector<1x128xi1>
    %23 = vector.broadcast %22 : vector<1x128xi1> to vector<8x128xi1>
    %24 = vector.broadcast %cst_7 : f32 to vector<8x128xf32>
    %25 = arith.select %23, %15, %24 : vector<8x128xi1>, vector<8x128xf32>
    %cst_8 = arith.constant 0.000000e+00 : f32
    %26 = vector.broadcast %cst_8 : f32 to vector<8x128xf32>
    %27 = arith.subf %26, %15 : vector<8x128xf32>
    %cst_9 = arith.constant 0xFF800000 : f32
    %28 = vector.shape_cast %21 : vector<1x128xi1> to vector<1x128xi1>
    %29 = vector.broadcast %28 : vector<1x128xi1> to vector<8x128xi1>
    %30 = vector.broadcast %cst_9 : f32 to vector<8x128xf32>
    %31 = arith.select %29, %27, %30 : vector<8x128xi1>, vector<8x128xf32>
    %c0_10 = arith.constant 0 : index
    %c0_11 = arith.constant 0 : index
    %32 = vector.load %arg7[%c0_10, %c0_11] : memref<8x1xf32, #tpu.memory_space<vmem>>, vector<8x1xf32>
    %c0_12 = arith.constant 0 : index
    %c0_13 = arith.constant 0 : index
    %33 = vector.load %arg8[%c0_12, %c0_13] : memref<8x1xf32, #tpu.memory_space<vmem>>, vector<8x1xf32>
    %cst_14 = arith.constant dense<0xFF800000> : vector<8xf32>
    %34 = vector.multi_reduction <maximumf>, %25, %cst_14 [1] : vector<8x128xf32> to vector<8xf32>
    %35 = vector.shape_cast %34 : vector<8xf32> to vector<8x1xf32>
    %36 = arith.maximumf %32, %35 : vector<8x1xf32>
    %cst_15 = arith.constant dense<0xFF800000> : vector<8xf32>
    %37 = vector.multi_reduction <maximumf>, %31, %cst_15 [1] : vector<8x128xf32> to vector<8xf32>
    %38 = vector.shape_cast %37 : vector<8xf32> to vector<8x1xf32>
    %39 = arith.maximumf %33, %38 : vector<8x1xf32>
    %cst_16 = arith.constant 0xFF800000 : f32
    %40 = vector.broadcast %cst_16 : f32 to vector<8x1xf32>
    %41 = arith.cmpf oeq, %32, %40 : vector<8x1xf32>
    %42 = arith.subf %32, %36 : vector<8x1xf32>
    %43 = math.exp %42 : vector<8x1xf32>
    %cst_17 = arith.constant 0.000000e+00 : f32
    %44 = vector.broadcast %cst_17 : f32 to vector<8x1xf32>
    %45 = arith.select %41, %44, %43 : vector<8x1xi1>, vector<8x1xf32>
    %cst_18 = arith.constant 0xFF800000 : f32
    %46 = vector.broadcast %cst_18 : f32 to vector<8x1xf32>
    %47 = arith.cmpf oeq, %33, %46 : vector<8x1xf32>
    %48 = arith.subf %33, %39 : vector<8x1xf32>
    %49 = math.exp %48 : vector<8x1xf32>
    %cst_19 = arith.constant 0.000000e+00 : f32
    %50 = vector.broadcast %cst_19 : f32 to vector<8x1xf32>
    %51 = arith.select %47, %50, %49 : vector<8x1xi1>, vector<8x1xf32>
    %52 = vector.broadcast %36 : vector<8x1xf32> to vector<8x128xf32>
    %53 = arith.subf %25, %52 : vector<8x128xf32>
    %54 = math.exp %53 : vector<8x128xf32>
    %55 = vector.broadcast %39 : vector<8x1xf32> to vector<8x128xf32>
    %56 = arith.subf %31, %55 : vector<8x128xf32>
    %57 = math.exp %56 : vector<8x128xf32>
    %c0_20 = arith.constant 0 : index
    %c0_21 = arith.constant 0 : index
    %58 = vector.load %arg4[%c0_20, %c0_21] : memref<8x3xi32, #tpu.memory_space<vmem>>, vector<8x3xi32>
    %c0_22 = arith.constant 0 : index
    %c0_23 = arith.constant 0 : index
    %59 = vector.load %arg5[%c0_22, %c0_23] : memref<3x128xi32, #tpu.memory_space<vmem>>, vector<3x128xi32>
    %60 = vector.extract_strided_slice %58 {offsets = [0, 0], sizes = [8, 1], strides = [1, 1]} : vector<8x3xi32> to vector<8x1xi32>
    %61 = vector.extract_strided_slice %59 {offsets = [0, 0], sizes = [1, 128], strides = [1, 1]} : vector<3x128xi32> to vector<1x128xi32>
    %62 = vector.broadcast %60 : vector<8x1xi32> to vector<8x128xi32>
    %63 = vector.broadcast %61 : vector<1x128xi32> to vector<8x128xi32>
    %64 = arith.cmpi eq, %62, %63 : vector<8x128xi32>
    %cst_24 = arith.constant dense<true> : vector<8x128xi1>
    %65 = arith.xori %64, %cst_24 : vector<8x128xi1>
    %66 = vector.broadcast %21 : vector<1x128xi1> to vector<8x128xi1>
    %67 = arith.andi %65, %66 : vector<8x128xi1>
    %cst_25 = arith.constant 0.000000e+00 : f32
    %68 = vector.broadcast %cst_25 : f32 to vector<8x128xf32>
    %69 = arith.select %67, %54, %68 : vector<8x128xi1>, vector<8x128xf32>
    %cst_26 = arith.constant dense<0.000000e+00> : vector<8xf32>
    %70 = vector.multi_reduction <add>, %69, %cst_26 [1] : vector<8x128xf32> to vector<8xf32>
    %71 = vector.shape_cast %70 : vector<8xf32> to vector<8x1xf32>
    %c0_27 = arith.constant 0 : index
    %c0_28 = arith.constant 0 : index
    %72 = vector.load %arg9[%c0_27, %c0_28] : memref<8x3xf32, #tpu.memory_space<vmem>>, vector<8x1xf32>
    %73 = arith.mulf %72, %45 : vector<8x1xf32>
    %74 = arith.addf %73, %71 : vector<8x1xf32>
    %c0_29 = arith.constant 0 : index
    %c0_30 = arith.constant 0 : index
    %75 = vector.load %arg9[%c0_29, %c0_30] : memref<8x3xf32, #tpu.memory_space<vmem>>, vector<8x1xf32>
    tpu.vector_store %arg9[%c0_29, %c0_30], %74 {strides = array<i32>} : memref<8x3xf32, #tpu.memory_space<vmem>>, vector<8x1xf32>,
    %cst_31 = arith.constant 0.000000e+00 : f32
    %76 = vector.broadcast %cst_31 : f32 to vector<8x128xf32>
    %77 = arith.select %64, %57, %76 : vector<8x128xi1>, vector<8x128xf32>
    %cst_32 = arith.constant dense<0.000000e+00> : vector<8xf32>
    %78 = vector.multi_reduction <add>, %77, %cst_32 [1] : vector<8x128xf32> to vector<8xf32>
    %79 = vector.shape_cast %78 : vector<8xf32> to vector<8x1xf32>
    %c0_33 = arith.constant 0 : index
    %c0_34 = arith.constant 0 : index
    %80 = vector.load %arg10[%c0_33, %c0_34] : memref<8x1xf32, #tpu.memory_space<vmem>>, vector<8x1xf32>
    %81 = arith.mulf %80, %51 : vector<8x1xf32>
    %82 = arith.addf %81, %79 : vector<8x1xf32>
    %c0_35 = arith.constant 0 : index
    %c0_36 = arith.constant 0 : index
    %83 = vector.load %arg10[%c0_35, %c0_36] : memref<8x1xf32, #tpu.memory_space<vmem>>, vector<8x1xf32>
    tpu.vector_store %arg10[%c0_35, %c0_36], %82 {strides = array<i32>} : memref<8x1xf32, #tpu.memory_space<vmem>>, vector<8x1xf32>,
    %84 = vector.extract_strided_slice %58 {offsets = [0, 1], sizes = [8, 1], strides = [1, 1]} : vector<8x3xi32> to vector<8x1xi32>
    %85 = vector.extract_strided_slice %59 {offsets = [1, 0], sizes = [1, 128], strides = [1, 1]} : vector<3x128xi32> to vector<1x128xi32>
    %86 = vector.broadcast %84 : vector<8x1xi32> to vector<8x128xi32>
    %87 = vector.broadcast %85 : vector<1x128xi32> to vector<8x128xi32>
    %88 = arith.cmpi eq, %86, %87 : vector<8x128xi32>
    %cst_37 = arith.constant dense<true> : vector<8x128xi1>
    %89 = arith.xori %88, %cst_37 : vector<8x128xi1>
    %90 = vector.broadcast %21 : vector<1x128xi1> to vector<8x128xi1>
    %91 = arith.andi %89, %90 : vector<8x128xi1>
    %cst_38 = arith.constant 0.000000e+00 : f32
    %92 = vector.broadcast %cst_38 : f32 to vector<8x128xf32>
    %93 = arith.select %91, %54, %92 : vector<8x128xi1>, vector<8x128xf32>
    %cst_39 = arith.constant dense<0.000000e+00> : vector<8xf32>
    %94 = vector.multi_reduction <add>, %93, %cst_39 [1] : vector<8x128xf32> to vector<8xf32>
    %95 = vector.shape_cast %94 : vector<8xf32> to vector<8x1xf32>
    %c0_40 = arith.constant 0 : index
    %c1 = arith.constant 1 : index
    %96 = vector.load %arg9[%c0_40, %c1] : memref<8x3xf32, #tpu.memory_space<vmem>>, vector<8x1xf32>
    %97 = arith.mulf %96, %45 : vector<8x1xf32>
    %98 = arith.addf %97, %95 : vector<8x1xf32>
    %c0_41 = arith.constant 0 : index
    %c1_42 = arith.constant 1 : index
    %99 = vector.load %arg9[%c0_41, %c1_42] : memref<8x3xf32, #tpu.memory_space<vmem>>, vector<8x1xf32>
    tpu.vector_store %arg9[%c0_41, %c1_42], %98 {strides = array<i32>} : memref<8x3xf32, #tpu.memory_space<vmem>>, vector<8x1xf32>,
    %100 = vector.extract_strided_slice %58 {offsets = [0, 2], sizes = [8, 1], strides = [1, 1]} : vector<8x3xi32> to vector<8x1xi32>
    %101 = vector.extract_strided_slice %59 {offsets = [2, 0], sizes = [1, 128], strides = [1, 1]} : vector<3x128xi32> to vector<1x128xi32>
    %102 = vector.broadcast %100 : vector<8x1xi32> to vector<8x128xi32>
    %103 = vector.broadcast %101 : vector<1x128xi32> to vector<8x128xi32>
    %104 = arith.cmpi eq, %102, %103 : vector<8x128xi32>
    %cst_43 = arith.constant dense<true> : vector<8x128xi1>
    %105 = arith.xori %104, %cst_43 : vector<8x128xi1>
    %106 = vector.broadcast %21 : vector<1x128xi1> to vector<8x128xi1>
    %107 = arith.andi %105, %106 : vector<8x128xi1>
    %cst_44 = arith.constant 0.000000e+00 : f32
    %108 = vector.broadcast %cst_44 : f32 to vector<8x128xf32>
    %109 = arith.select %107, %54, %108 : vector<8x128xi1>, vector<8x128xf32>
    %cst_45 = arith.constant dense<0.000000e+00> : vector<8xf32>
    %110 = vector.multi_reduction <add>, %109, %cst_45 [1] : vector<8x128xf32> to vector<8xf32>
    %111 = vector.shape_cast %110 : vector<8xf32> to vector<8x1xf32>
    %c0_46 = arith.constant 0 : index
    %c2 = arith.constant 2 : index
    %112 = vector.load %arg9[%c0_46, %c2] : memref<8x3xf32, #tpu.memory_space<vmem>>, vector<8x1xf32>
    %113 = arith.mulf %112, %45 : vector<8x1xf32>
    %114 = arith.addf %113, %111 : vector<8x1xf32>
    %c0_47 = arith.constant 0 : index
    %c2_48 = arith.constant 2 : index
    %115 = vector.load %arg9[%c0_47, %c2_48] : memref<8x3xf32, #tpu.memory_space<vmem>>, vector<8x1xf32>
    tpu.vector_store %arg9[%c0_47, %c2_48], %114 {strides = array<i32>} : memref<8x3xf32, #tpu.memory_space<vmem>>, vector<8x1xf32>,
    %c0_49 = arith.constant 0 : index
    %c0_50 = arith.constant 0 : index
    %116 = vector.load %arg7[%c0_49, %c0_50] : memref<8x1xf32, #tpu.memory_space<vmem>>, vector<8x1xf32>
    tpu.vector_store %arg7[%c0_49, %c0_50], %36 {strides = array<i32>} : memref<8x1xf32, #tpu.memory_space<vmem>>, vector<8x1xf32>,
    %c0_51 = arith.constant 0 : index
    %c0_52 = arith.constant 0 : index
    %117 = vector.load %arg8[%c0_51, %c0_52] : memref<8x1xf32, #tpu.memory_space<vmem>>, vector<8x1xf32>
    tpu.vector_store %arg8[%c0_51, %c0_52], %39 {strides = array<i32>} : memref<8x1xf32, #tpu.memory_space<vmem>>, vector<8x1xf32>,
    %c0_i32_53 = arith.constant 0 : i32
    %118 = arith.cmpi eq, %arg1, %c0_i32_53 : i32
    %119 = arith.extui %118 : i1 to i32
    %c0_i32_54 = arith.constant 0 : i32
    %120 = arith.cmpi ne, %119, %c0_i32_54 : i32
    scf.if %120 {
      %c0_55 = arith.constant 0 : index
      %c0_56 = arith.constant 0 : index
      %121 = vector.load %arg8[%c0_55, %c0_56] : memref<8x1xf32, #tpu.memory_space<vmem>>, vector<8x1xf32>
      %c0_57 = arith.constant 0 : index
      %c0_58 = arith.constant 0 : index
      %122 = vector.load %arg10[%c0_57, %c0_58] : memref<8x1xf32, #tpu.memory_space<vmem>>, vector<8x1xf32>
      %123 = math.log %122 : vector<8x1xf32>
      %124 = arith.addf %121, %123 : vector<8x1xf32>
      %c0_59 = arith.constant 0 : index
      %c0_60 = arith.constant 0 : index
      %125 = vector.load %arg7[%c0_59, %c0_60] : memref<8x1xf32, #tpu.memory_space<vmem>>, vector<8x1xf32>
      %c0_61 = arith.constant 0 : index
      %c0_62 = arith.constant 0 : index
      %126 = vector.load %arg9[%c0_61, %c0_62] : memref<8x3xf32, #tpu.memory_space<vmem>>, vector<8x1xf32>
      %127 = math.log %126 : vector<8x1xf32>
      %128 = arith.addf %125, %127 : vector<8x1xf32>
      %129 = arith.addf %128, %124 : vector<8x1xf32>
      %cst_63 = arith.constant 8.000000e+00 : f32
      %130 = vector.broadcast %cst_63 : f32 to vector<8x1xf32>
      %131 = arith.addf %129, %130 : vector<8x1xf32>
      %cst_64 = arith.constant 0.000000e+00 : f32
      %132 = vector.broadcast %cst_64 : f32 to vector<8x1xf32>
      %133 = arith.maximumf %131, %132 : vector<8x1xf32>
      %134 = math.absf %131 : vector<8x1xf32>
      %cst_65 = arith.constant 0.000000e+00 : f32
      %135 = vector.broadcast %cst_65 : f32 to vector<8x1xf32>
      %136 = arith.subf %135, %134 : vector<8x1xf32>
      %137 = math.exp %136 : vector<8x1xf32>
      %138 = math.log1p %137 : vector<8x1xf32>
      %139 = arith.addf %133, %138 : vector<8x1xf32>
      %c0_66 = arith.constant 0 : index
      %c0_67 = arith.constant 0 : index
      %140 = vector.load %arg6[%c0_66, %c0_67] : memref<8x3xf32, #tpu.memory_space<vmem>>, vector<8x1xf32>
      tpu.vector_store %arg6[%c0_66, %c0_67], %139 {strides = array<i32>} : memref<8x3xf32, #tpu.memory_space<vmem>>, vector<8x1xf32>,
      %c0_68 = arith.constant 0 : index
      %c0_69 = arith.constant 0 : index
      %141 = vector.load %arg7[%c0_68, %c0_69] : memref<8x1xf32, #tpu.memory_space<vmem>>, vector<8x1xf32>
      %c0_70 = arith.constant 0 : index
      %c1_71 = arith.constant 1 : index
      %142 = vector.load %arg9[%c0_70, %c1_71] : memref<8x3xf32, #tpu.memory_space<vmem>>, vector<8x1xf32>
      %143 = math.log %142 : vector<8x1xf32>
      %144 = arith.addf %141, %143 : vector<8x1xf32>
      %145 = arith.addf %144, %124 : vector<8x1xf32>
      %cst_72 = arith.constant 1.120000e+01 : f32
      %146 = vector.broadcast %cst_72 : f32 to vector<8x1xf32>
      %147 = arith.addf %145, %146 : vector<8x1xf32>
      %cst_73 = arith.constant 0.000000e+00 : f32
      %148 = vector.broadcast %cst_73 : f32 to vector<8x1xf32>
      %149 = arith.maximumf %147, %148 : vector<8x1xf32>
      %150 = math.absf %147 : vector<8x1xf32>
      %cst_74 = arith.constant 0.000000e+00 : f32
      %151 = vector.broadcast %cst_74 : f32 to vector<8x1xf32>
      %152 = arith.subf %151, %150 : vector<8x1xf32>
      %153 = math.exp %152 : vector<8x1xf32>
      %154 = math.log1p %153 : vector<8x1xf32>
      %155 = arith.addf %149, %154 : vector<8x1xf32>
      %c0_75 = arith.constant 0 : index
      %c1_76 = arith.constant 1 : index
      %156 = vector.load %arg6[%c0_75, %c1_76] : memref<8x3xf32, #tpu.memory_space<vmem>>, vector<8x1xf32>
      tpu.vector_store %arg6[%c0_75, %c1_76], %155 {strides = array<i32>} : memref<8x3xf32, #tpu.memory_space<vmem>>, vector<8x1xf32>,
      %c0_77 = arith.constant 0 : index
      %c0_78 = arith.constant 0 : index
      %157 = vector.load %arg7[%c0_77, %c0_78] : memref<8x1xf32, #tpu.memory_space<vmem>>, vector<8x1xf32>
      %c0_79 = arith.constant 0 : index
      %c2_80 = arith.constant 2 : index
      %158 = vector.load %arg9[%c0_79, %c2_80] : memref<8x3xf32, #tpu.memory_space<vmem>>, vector<8x1xf32>
      %159 = math.log %158 : vector<8x1xf32>
      %160 = arith.addf %157, %159 : vector<8x1xf32>
      %161 = arith.addf %160, %124 : vector<8x1xf32>
      %cst_81 = arith.constant 1.440000e+01 : f32
      %162 = vector.broadcast %cst_81 : f32 to vector<8x1xf32>
      %163 = arith.addf %161, %162 : vector<8x1xf32>
      %cst_82 = arith.constant 0.000000e+00 : f32
      %164 = vector.broadcast %cst_82 : f32 to vector<8x1xf32>
      %165 = arith.maximumf %163, %164 : vector<8x1xf32>
      %166 = math.absf %163 : vector<8x1xf32>
      %cst_83 = arith.constant 0.000000e+00 : f32
      %167 = vector.broadcast %cst_83 : f32 to vector<8x1xf32>
      %168 = arith.subf %167, %166 : vector<8x1xf32>
      %169 = math.exp %168 : vector<8x1xf32>
      %170 = math.log1p %169 : vector<8x1xf32>
      %171 = arith.addf %165, %170 : vector<8x1xf32>
      %c0_84 = arith.constant 0 : index
      %c2_85 = arith.constant 2 : index
      %172 = vector.load %arg6[%c0_84, %c2_85] : memref<8x3xf32, #tpu.memory_space<vmem>>, vector<8x1xf32>
      tpu.vector_store %arg6[%c0_84, %c2_85], %171 {strides = array<i32>} : memref<8x3xf32, #tpu.memory_space<vmem>>, vector<8x1xf32>,
    } else {
    }
    return
  }
  func.func @transform_0(%arg0: i32, %arg1: i32) -> (i32, i32) {
    %c0_i32 = arith.constant 0 : i32
    %c0_i32_0 = arith.constant 0 : i32
    return %arg0, %c0_i32 : i32, i32
  }
  func.func @transform_1(%arg0: i32, %arg1: i32) -> (i32, i32) {
    %c0_i32 = arith.constant 0 : i32
    %c0_i32_0 = arith.constant 0 : i32
    return %c0_i32, %arg1 : i32, i32
  }
  func.func @transform_2(%arg0: i32, %arg1: i32) -> (i32, i32) {
    %c0_i32 = arith.constant 0 : i32
    %c0_i32_0 = arith.constant 0 : i32
    return %arg0, %c0_i32 : i32, i32
  }
  func.func @transform_3(%arg0: i32, %arg1: i32) -> (i32, i32) {
    %c0_i32 = arith.constant 0 : i32
    %c0_i32_0 = arith.constant 0 : i32
    return %c0_i32, %arg1 : i32, i32
  }
  func.func @transform_4(%arg0: i32, %arg1: i32) -> (i32, i32) {
    %c0_i32 = arith.constant 0 : i32
    %c0_i32_0 = arith.constant 0 : i32
    return %arg0, %c0_i32 : i32, i32
  }
}

</mosaic_0001>

<llo_original>
// kernel: tpu_custom_call.1
$region0: #{tpu_custom_call.1}
  #allocation0 [shape = 'u32[]', space=smem, size = 0x4, offset = 0x4, fixed_abs, tag = 'smem constant byte address 0x4 - core index']
  #allocation1 [shape = 'u32[144,128]{1,0:T(1,128)}', space=vmem, size = 0x12000, scoped, tag = 'internal scratch']
  #allocation2 [shape = 'f32[8,1]{1,0:T(8,128)}', space=vmem, size = 0x1000, scoped, tag = 'scratch operand']
  #allocation3 [shape = 'f32[8,1]{1,0:T(8,128)}', space=vmem, size = 0x1000, scoped, tag = 'scratch operand']
  #allocation4 [shape = 'f32[8,3]{1,0:T(8,128)}', space=vmem, size = 0x1000, scoped, tag = 'scratch operand']
  #allocation5 [shape = 'f32[8,1]{1,0:T(8,128)}', space=vmem, size = 0x1000, scoped, tag = 'scratch operand']
  %s0 = inlined_call_operand.vmem [shape: f32[8,128], index: 0, kind: input, shape index: {}]
  %s1 = inlined_call_operand.hbm [shape: f32[128,128], index: 1, kind: input, shape index: {}]
  %s2 = inlined_call_operand.vmem [shape: s32[8,3], index: 2, kind: input, shape index: {}]
  %s3 = inlined_call_operand.vmem [shape: s32[3,128], index: 3, kind: input, shape index: {}]
  %s4 = inlined_call_operand.vmem [shape: f32[8,3], index: 4, kind: output, shape index: {}]
  %s5 = sld [smem:[#allocation0]]
  $region38: #{tpu_custom_call.1} parent=0
    _
  %s7 = ssub.s32 1, %s5
  %s8 = scalar_select 0, %s7, %s5
  $region1: #{tpu_custom_call.1} parent=0
    #allocation6 [shape = 'u8[65536]{0}', space=vmem, size = 0x10000, scoped, tag = 'input window, operand 1, single buffered']
    #allocation7 [shape = 's32[1]{0}', space=sflag, size = 0x4, scoped, tag = 'scoped memory for tpu_custom_call.1']
    %9 = vsyncpa [#allocation7], 0
    // Predicated region
    $region2: #{tpu_custom_call.1} parent=1 // pred_check
      _
    $region3: #{tpu_custom_call.1} parent=1 // pred_check_branch
      %11 = sbr.rel (0) target = $region5
    $region4: #{tpu_custom_call.1} parent=1 // pred_region
      _
    $region5: #{tpu_custom_call.1} parent=1 // pred_fallthru
      _
    // Predicated region
    $region6: #{tpu_custom_call.1} parent=1 // pred_check
      _
    $region7: #{tpu_custom_call.1} parent=1 // pred_check_branch
      %13 = sbr.rel (0) target = $region9
    $region8: #{tpu_custom_call.1} parent=1 // pred_region
      %s15 = ssub.s32 2048, 2048
      %16 = vsyncadd [#allocation7], %s15
      %s17 = sshll.u32 [#allocation6], 4
      %s18 = int_to_ptr.vmem [resolvable:$true] %s17
      %23 = dma.hbm_to_vmem [thread:$0]  %s1, 2048, %s18, [#allocation7], 128, 128, 8
    $region9: #{tpu_custom_call.1} parent=1 // pred_fallthru
      _
    // Predicated region
    $region10: #{tpu_custom_call.1} parent=1 // pred_check
      _
    $region11: #{tpu_custom_call.1} parent=1 // pred_check_branch
      %25 = sbr.rel (0) target = $region13
    $region12: #{tpu_custom_call.1} parent=1 // pred_region
      _
    $region13: #{tpu_custom_call.1} parent=1 // pred_fallthru
      _
    // Predicated region
    $region14: #{tpu_custom_call.1} parent=1 // pred_check
      _
    $region15: #{tpu_custom_call.1} parent=1 // pred_check_branch
      %27 = sbr.rel (0) target = $region17
    $region16: #{tpu_custom_call.1} parent=1 // pred_region
      _
    $region17: #{tpu_custom_call.1} parent=1 // pred_fallthru
      _
    // Predicated region
    $region18: #{tpu_custom_call.1} parent=1 // pred_check
      _
    $region19: #{tpu_custom_call.1} parent=1 // pred_check_branch
      %29 = sbr.rel (0) target = $region21
    $region20: #{tpu_custom_call.1} parent=1 // pred_region
      %30 = dma.done [#allocation7], 2048
    $region21: #{tpu_custom_call.1} parent=1 // pred_fallthru
      _
    %p31 = scmp.eq.s32.totalorder 0, 0
    // Predicated region
    $region22: #{tpu_custom_call.1} parent=1 // pred_check
      %p32 = pneg %p31
    $region23: #{tpu_custom_call.1} parent=1 // pred_check_branch
      %34 = sbr.rel (%p32) target = $region25
    $region24: #{tpu_custom_call.1} parent=1 // pred_region
      %vm35 = vcmask 7168
      %36 = vst.msk [vmem:[#allocation2] sm:$0xff] %vm35, -inf
      %37 = vst.msk [vmem:[#allocation3] sm:$0xff] %vm35, -inf
      %vm38 = vcmask 23552
      %39 = vst.msk [vmem:[#allocation4] sm:$0xff] %vm38, 0.0
      %40 = vst.msk [vmem:[#allocation5] sm:$0xff] %vm35, 0.0
    $region25: #{tpu_custom_call.1} parent=1 // pred_fallthru
      _
    %v41 = vld [vmem:[%s0] sm:$0xff]
    %v42 = vld [vmem:[#allocation6] sm:$0xff]
    %v43 = vld [vmem:[#allocation6 + $0x8] sm:$0xff]
    %v44 = vld [vmem:[#allocation6 + $0x10] sm:$0xff]
    %v45 = vld [vmem:[#allocation6 + $0x18] sm:$0xff]
    %v46 = vld [vmem:[#allocation6 + $0x20] sm:$0xff]
    %v47 = vld [vmem:[#allocation6 + $0x28] sm:$0xff]
    %v48 = vld [vmem:[#allocation6 + $0x30] sm:$0xff]
    %v49 = vld [vmem:[#allocation6 + $0x38] sm:$0xff]
    %v50 = vld [vmem:[#allocation6 + $0x40] sm:$0xff]
    %v51 = vld [vmem:[#allocation6 + $0x48] sm:$0xff]
    %v52 = vld [vmem:[#allocation6 + $0x50] sm:$0xff]
    %v53 = vld [vmem:[#allocation6 + $0x58] sm:$0xff]
    %v54 = vld [vmem:[#allocation6 + $0x60] sm:$0xff]
    %v55 = vld [vmem:[#allocation6 + $0x68] sm:$0xff]
    %v56 = vld [vmem:[#allocation6 + $0x70] sm:$0xff]
    %v57 = vld [vmem:[#allocation6 + $0x78] sm:$0xff]
    %58 = vmatprep.subr.mxu0 0.0
    %59 = vmatpush1.msra.mxu0 %v42
    %60 = vmatprep.subr.mxu0 0.0
    %61 = vmatpush1.msra.mxu0 %v43
    %62 = vmatprep.subr.mxu0 0.0
    %63 = vmatpush1.msra.mxu0 %v44
    %64 = vmatprep.subr.mxu0 0.0
    %65 = vmatpush1.msra.mxu0 %v45
    %66 = vmatprep.subr.mxu0 0.0
    %67 = vmatpush1.msra.mxu0 %v46
    %68 = vmatprep.subr.mxu0 0.0
    %69 = vmatpush1.msra.mxu0 %v47
    %70 = vmatprep.subr.mxu0 0.0
    %71 = vmatpush1.msra.mxu0 %v48
    %72 = vmatprep.subr.mxu0 0.0
    %73 = vmatpush1.msra.mxu0 %v49
    %74 = vmatprep.subr.mxu0 0.0
    %75 = vmatpush1.msra.mxu0 %v50
    %76 = vmatprep.subr.mxu0 0.0
    %77 = vmatpush1.msra.mxu0 %v51
    %78 = vmatprep.subr.mxu0 0.0
    %79 = vmatpush1.msra.mxu0 %v52
    %80 = vmatprep.subr.mxu0 0.0
    %81 = vmatpush1.msra.mxu0 %v53
    %82 = vmatprep.subr.mxu0 0.0
    %83 = vmatpush1.msra.mxu0 %v54
    %84 = vmatprep.subr.mxu0 0.0
    %85 = vmatpush1.msra.mxu0 %v55
    %86 = vmatprep.subr.mxu0 0.0
    %87 = vmatpush1.msra.mxu0 %v56
    %88 = vmatprep.subr.mxu0 0.0
    %89 = vmatpush1.msra.mxu0 %v57
    %90 = vmatprep.subr.mxu0 0.0
    %91 = vmatpush1.msra.mxu0 0.0
    %92 = vmatprep.subr.mxu0 0.0
    %93 = vmatpush1.msra.mxu0 0.0
    %94 = vmatprep.subr.mxu0 0.0
    %95 = vmatpush1.msra.mxu0 0.0
    %96 = vmatprep.subr.mxu0 0.0
    %97 = vmatpush1.msra.mxu0 0.0
    %98 = vmatprep.subr.mxu0 0.0
    %99 = vmatpush1.msra.mxu0 0.0
    %100 = vmatprep.subr.mxu0 0.0
    %101 = vmatpush1.msra.mxu0 0.0
    %102 = vmatprep.subr.mxu0 0.0
    %103 = vmatpush1.msra.mxu0 0.0
    %104 = vmatprep.subr.mxu0 0.0
    %105 = vmatpush1.msra.mxu0 0.0
    %106 = vmatprep.subr.mxu0 0.0
    %107 = vmatpush1.msra.mxu0 0.0
    %108 = vmatprep.subr.mxu0 0.0
    %109 = vmatpush1.msra.mxu0 0.0
    %110 = vmatprep.subr.mxu0 0.0
    %111 = vmatpush1.msra.mxu0 0.0
    %112 = vmatprep.subr.mxu0 0.0
    %113 = vmatpush1.msra.mxu0 0.0
    %114 = vmatprep.subr.mxu0 0.0
    %115 = vmatpush1.msra.mxu0 0.0
    %116 = vmatprep.subr.mxu0 0.0
    %117 = vmatpush1.msra.mxu0 0.0
    %118 = vmatprep.subr.mxu0 0.0
    %119 = vmatpush1.msra.mxu0 0.0
    %120 = vmatprep.subr.mxu0 0.0
    %121 = vmatpush1.msra.mxu0 0.0
    %122 = vmatprep.mubr.f32.mxu0 0.0
    %123 = vmatmul.mubr.f32.gmra.mrb[0].mxu0 %v41
    %v124 = vpop.f32.mrb[0].mxu0
    %v125 = vadd.f32 0.0, %v124
    %v126 = vpop.f32.mrb[0].mxu0
    %127 = vdwg.mxu0
    %v128 = vmul.f32 %v42, %v42
    %v129 = vmul.f32 %v43, %v43
    %v130 = vmul.f32 %v44, %v44
    %v131 = vmul.f32 %v45, %v45
    %v132 = vmul.f32 %v46, %v46
    %v133 = vmul.f32 %v47, %v47
    %v134 = vmul.f32 %v48, %v48
    %v135 = vmul.f32 %v49, %v49
    %v136 = vmul.f32 %v50, %v50
    %v137 = vmul.f32 %v51, %v51
    %v138 = vmul.f32 %v52, %v52
    %v139 = vmul.f32 %v53, %v53
    %v140 = vmul.f32 %v54, %v54
    %v141 = vmul.f32 %v55, %v55
    %v142 = vmul.f32 %v56, %v56
    %v143 = vmul.f32 %v57, %v57
    %v144 = vadd.f32 %v128, %v129
    %v145 = vadd.f32 %v144, %v130
    %v146 = vadd.f32 %v145, %v131
    %v147 = vadd.f32 %v146, %v132
    %v148 = vadd.f32 %v147, %v133
    %v149 = vadd.f32 %v148, %v134
    %v150 = vadd.f32 %v149, %v135
    %v151 = vadd.f32 %v150, %v136
    %v152 = vadd.f32 %v151, %v137
    %v153 = vadd.f32 %v152, %v138
    %v154 = vadd.f32 %v153, %v139
    %v155 = vadd.f32 %v154, %v140
    %v156 = vadd.f32 %v155, %v141
    %v157 = vadd.f32 %v156, %v142
    %v158 = vadd.f32 %v157, %v143
    %v159 = vrot.slane %v158, 4
    %v160 = vadd.f32 %v158, %v159
    %v161 = vrot.slane %v160, 2
    %v162 = vadd.f32 %v160, %v161
    %v163 = vrot.slane %v162, 1
    %v164 = vadd.f32 %v162, %v163
    %v165 = vrsqrt.pop %v164
    %v166 = vmul.f32 %v164, %v165
    %vm167 = vcmp.eq.f32.partialorder %v164, inf
    %v168 = vsel %vm167, %v164, %v166
    %vm169 = vcmp.eq.f32.partialorder %v164, 0.0
    %v170 = vand.u32 %v164, 2147483648
    %v171 = vsel %vm169, %v170, %v168
    %v172 = vmax.f32 %v171, 1e-12
    %v173 = vrcp.pop %v172
    %v174 = vmul.f32 32.0, %v173
    %v175 = vmul.f32 %v125, %v174
    %v176 = vlaneseq
    %v177 = vand.u32 %v176, 127
    %s178 = smul.u32 0, 128
    %v179 = vstv %s178
    %v180 = vadd.s32 %v177, %v179
    %vm181 = vcmp.lt.s32.totalorder %v180, 16
    %v182 = vsel %vm181, 1, 0
    %vm183 = vcmp.eq.s32.totalorder %v182, 1
    %v184 = vsel %vm183, %v175, -inf
    %v185 = vsub.f32 0.0, %v175
    %v186 = vsel %vm183, %v185, -inf
    %v187 = vld [vmem:[#allocation2] sm:$0xff]
    %v188 = vld [vmem:[#allocation3] sm:$0xff]
    %189 = vmax.xlane.f32.xlu0 %v184
    %v190 = vpop.xlane.xlu0 %189
    %v191 = vmax.f32 %v187, %v190
    %192 = vmax.xlane.f32.xlu0 %v186
    %v193 = vpop.xlane.xlu0 %192
    %v194 = vmax.f32 %v188, %v193
    %vm195 = vcmp.eq.f32.partialorder %v187, -inf
    %v196 = vsub.f32 %v187, %v191
    %v197 = vmul.f32 %v196, 1.442695
    %v198 = vpow.pop %v197
    %v199 = vsel %vm195, 0.0, %v198
    %vm200 = vcmp.eq.f32.partialorder %v188, -inf
    %v201 = vsub.f32 %v188, %v194
    %v202 = vmul.f32 %v201, 1.442695
    %v203 = vpow.pop %v202
    %v204 = vsel %vm200, 0.0, %v203
    %206 = vset.pattern.permute.xlu0 0
    %207 = vperm.xlu0 %206, %v191
    %v208 = vpop.permute.xlu0 %207
    %v210 = vsub.f32 %v184, %v208
    %v211 = vmul.f32 %v210, 1.442695
    %v212 = vpow.pop %v211
    %214 = vset.pattern.permute.xlu0 0
    %215 = vperm.xlu0 %214, %v194
    %v216 = vpop.permute.xlu0 %215
    %v218 = vsub.f32 %v186, %v216
    %v219 = vmul.f32 %v218, 1.442695
    %v220 = vpow.pop %v219
    %v221 = vld [vmem:[%s2] sm:$0xff]
    %v222 = vld [vmem:[%s3] sm:$0x7]
    %223 = vset.pattern.permute.xlu0 0
    %224 = vperm.xlu0 %223, %v221
    %v225 = vpop.permute.xlu0 %224
    %v226 = vlaneseq
    %v227 = vshrl.u32 %v226, 7
    %v228 = vsub.s32 0, %v227
    %v229 = vrot.slane %v222, %v228
    %vm230 = vcmp.eq.s32.totalorder %v225, %v229
    %vm231 = vmxor %vm230, 1
    %vm232 = vmand %vm231, %vm183
    %v233 = vsel %vm232, %v212, 0.0
    %234 = vadd.xlane.f32.xlu0 %v233
    %v235 = vpop.xlane.xlu0 %234
    %v236 = vld [vmem:[#allocation4] sm:$0xff]
    %v237 = vmul.f32 %v236, %v199
    %v238 = vadd.f32 %v237, %v235
    %vm239 = vcmask 7168
    %240 = vst.msk [vmem:[#allocation4] sm:$0xff] %vm239, %v238
    %v241 = vsel %vm230, %v220, 0.0
    %242 = vadd.xlane.f32.xlu0 %v241
    %v243 = vpop.xlane.xlu0 %242
    %v244 = vld [vmem:[#allocation5] sm:$0xff]
    %v245 = vmul.f32 %v244, %v204
    %v246 = vadd.f32 %v245, %v243
    %247 = vst.msk [vmem:[#allocation5] sm:$0xff] %vm239, %v246
    %248 = vset.pattern.permute.xlu0 1
    %249 = vperm.xlu0 %248, %v221
    %v250 = vpop.permute.xlu0 %249
    %v251 = vlaneseq
    %v252 = vshrl.u32 %v251, 7
    %v253 = vsub.s32 1, %v252
    %v254 = vrot.slane %v222, %v253
    %vm255 = vcmp.eq.s32.totalorder %v250, %v254
    %vm256 = vmxor %vm255, 1
    %vm257 = vmand %vm256, %vm183
    %v258 = vsel %vm257, %v212, 0.0
    %259 = vadd.xlane.f32.xlu0 %v258
    %v260 = vpop.xlane.xlu0 %259
    %v261 = vld [vmem:[#allocation4] sm:$0xff]
    %263 = vrot.lane.b32.xlu0 %v199, 1
    %v264 = vpop.permute.xlu0 %263
    %v266 = vmul.f32 %v261, %v264
    %v267 = vadd.f32 %v266, %v260
    %vm268 = vcmask 15368
    %269 = vst.msk [vmem:[#allocation4] sm:$0xff] %vm268, %v267
    %270 = vset.pattern.permute.xlu0 2
    %271 = vperm.xlu0 %270, %v221
    %v272 = vpop.permute.xlu0 %271
    %v273 = vlaneseq
    %v274 = vshrl.u32 %v273, 7
    %v275 = vsub.s32 2, %v274
    %v276 = vrot.slane %v222, %v275
    %vm277 = vcmp.eq.s32.totalorder %v272, %v276
    %vm278 = vmxor %vm277, 1
    %vm279 = vmand %vm278, %vm183
    %v280 = vsel %vm279, %v212, 0.0
    %281 = vadd.xlane.f32.xlu0 %v280
    %v282 = vpop.xlane.xlu0 %281
    %v283 = vld [vmem:[#allocation4] sm:$0xff]
    %284 = vrot.lane.b32.xlu0 %v199, 2
    %v285 = vpop.permute.xlu0 %284
    %v287 = vmul.f32 %v283, %v285
    %v288 = vadd.f32 %v287, %v282
    %vm289 = vcmask 23568
    %290 = vst.msk [vmem:[#allocation4] sm:$0xff] %vm289, %v288
    %291 = vst.msk [vmem:[#allocation2] sm:$0xff] %vm239, %v191
    %292 = vst.msk [vmem:[#allocation3] sm:$0xff] %vm239, %v194
    // Predicated region
    $region26: #{tpu_custom_call.1} parent=1 // pred_check
      %p293 = pneg %p31
    $region27: #{tpu_custom_call.1} parent=1 // pred_check_branch
      %295 = sbr.rel (%p293) target = $region29
    $region28: #{tpu_custom_call.1} parent=1 // pred_region
      %v296 = vld [vmem:[#allocation3] sm:$0xff]
      %v297 = vld [vmem:[#allocation5] sm:$0xff]
      %v298 = vlog2.pop %v297
      %v299 = vmul.f32 %v298, 0.6931472
      %v300 = vadd.f32 %v296, %v299
      %v301 = vld [vmem:[#allocation2] sm:$0xff]
      %v302 = vld [vmem:[#allocation4] sm:$0xff]
      %v303 = vlog2.pop %v302
      %v304 = vmul.f32 %v303, 0.6931472
      %v305 = vadd.f32 %v301, %v304
      %v306 = vadd.f32 %v305, %v300
      %v307 = vadd.f32 %v306, 8.0
      %v308 = vmax.f32 %v307, 0.0
      %v309 = vand.u32 2147483647, %v307
      %v310 = vsub.f32 0.0, %v309
      %v311 = vmul.f32 %v310, 1.442695
      %v312 = vpow.pop %v311
      %v313 = vadd.f32 %v312, 1.0
      %v314 = vlog2.pop %v313
      %v315 = vmul.f32 %v314, 0.6931472
      %v316 = vmul.f32 -0.5, %v312
      %v317 = vadd.f32 %v316, 1.0
      %v318 = vmul.f32 %v317, %v312
      %v319 = vand.u32 2147483647, %v312
      %vm320 = vcmp.lt.f32.partialorder %v319, 0.0004427343
      %v321 = vsel %vm320, %v318, %v315
      %v322 = vadd.f32 %v308, %v321
      %323 = vst.msk [vmem:[%s4] sm:$0xff] %vm239, %v322
      %v324 = vld [vmem:[#allocation2] sm:$0xff]
      %v325 = vld [vmem:[#allocation4] sm:$0xff]
      %v326 = vlog2.pop %v325
      %v327 = vmul.f32 %v326, 0.6931472
      %329 = vrot.lane.b32.xlu0 %v327, 127
      %v330 = vpop.permute.xlu0 %329
      %v332 = vadd.f32 %v324, %v330
      %v333 = vadd.f32 %v332, %v300
      %v334 = vadd.f32 %v333, 11.2
      %v335 = vmax.f32 %v334, 0.0
      %v336 = vand.u32 2147483647, %v334
      %v337 = vsub.f32 0.0, %v336
      %v338 = vmul.f32 %v337, 1.442695
      %v339 = vpow.pop %v338
      %v340 = vadd.f32 %v339, 1.0
      %v341 = vlog2.pop %v340
      %v342 = vmul.f32 %v341, 0.6931472
      %v343 = vmul.f32 -0.5, %v339
      %v344 = vadd.f32 %v343, 1.0
      %v345 = vmul.f32 %v344, %v339
      %v346 = vand.u32 2147483647, %v339
      %vm347 = vcmp.lt.f32.partialorder %v346, 0.0004427343
      %v348 = vsel %vm347, %v345, %v342
      %v349 = vadd.f32 %v335, %v348
      %351 = vrot.lane.b32.xlu0 %v349, 1
      %v352 = vpop.permute.xlu0 %351
      %354 = vst.msk [vmem:[%s4] sm:$0xff] %vm268, %v352
      %v355 = vld [vmem:[#allocation2] sm:$0xff]
      %v356 = vld [vmem:[#allocation4] sm:$0xff]
      %v357 = vlog2.pop %v356
      %v358 = vmul.f32 %v357, 0.6931472
      %360 = vrot.lane.b32.xlu0 %v358, 126
      %v361 = vpop.permute.xlu0 %360
      %v363 = vadd.f32 %v355, %v361
      %v364 = vadd.f32 %v363, %v300
      %v365 = vadd.f32 %v364, 14.4
      %v366 = vmax.f32 %v365, 0.0
      %v367 = vand.u32 2147483647, %v365
      %v368 = vsub.f32 0.0, %v367
      %v369 = vmul.f32 %v368, 1.442695
      %v370 = vpow.pop %v369
      %v371 = vadd.f32 %v370, 1.0
      %v372 = vlog2.pop %v371
      %v373 = vmul.f32 %v372, 0.6931472
      %v374 = vmul.f32 -0.5, %v370
      %v375 = vadd.f32 %v374, 1.0
      %v376 = vmul.f32 %v375, %v370
      %v377 = vand.u32 2147483647, %v370
      %vm378 = vcmp.lt.f32.partialorder %v377, 0.0004427343
      %v379 = vsel %vm378, %v376, %v373
      %v380 = vadd.f32 %v366, %v379
      %382 = vrot.lane.b32.xlu0 %v380, 2
      %v383 = vpop.permute.xlu0 %382
      %385 = vst.msk [vmem:[%s4] sm:$0xff] %vm289, %v383
    $region29: #{tpu_custom_call.1} parent=1 // pred_fallthru
      _
    // Predicated region
    $region30: #{tpu_custom_call.1} parent=1 // pred_check
      _
    $region31: #{tpu_custom_call.1} parent=1 // pred_check_branch
      %387 = sbr.rel (0) target = $region33
    $region32: #{tpu_custom_call.1} parent=1 // pred_region
      _
    $region33: #{tpu_custom_call.1} parent=1 // pred_fallthru
      _
    // Predicated region
    $region34: #{tpu_custom_call.1} parent=1 // pred_check
      _
    $region35: #{tpu_custom_call.1} parent=1 // pred_check_branch
      %389 = sbr.rel (0) target = $region37
    $region36: #{tpu_custom_call.1} parent=1 // pred_region
      _
    $region37: #{tpu_custom_call.1} parent=1 // pred_fallthru
      _
    %390 = vsyncpa [#allocation7], 1

</llo_original>
